<compile_context>
chip_gen: v7x
topology: tpu7x:2x2x1
jax: 0.10.0
libtpu: 0.0.40
codegen_flags: <defaults>
</compile_context>

<pallas_src>
import jax
import jax.numpy as jnp
from jax.experimental import pallas as pl
from jax.experimental.pallas import tpu as pltpu

_ROW_MULT = 8          # f32 sublane packing (x / y stay f32 in HBM)
_BM_CAP = 2048         # rows per grid step; a few MiB of VMEM even in f32
_SPLIT_ROWS = 256      # above this, prefer >=2 grid steps (v7x megacore)
_PALLAS_MIN_ROWS = 16  # below this, plain XLA fusion wins on dispatch overhead


def _round_up(n, m):
    return (n + m - 1) // m * m


def _mlp_kernel(x_ref, w1_ref, b1_ref, w2_ref, b2_ref, o_ref):
    # x_ref:  (bm, in_f)    f32 (cast to the weights' compute dtype in-register)
    # w1_ref: (in_f, hid_f) compute dtype    b1_ref: (1, hid_f) f32
    # w2_ref: (hid_f, out_f) compute dtype   b2_ref: (1, out_f) f32
    # o_ref:  (bm, out_f)   f32
    x = x_ref[...].astype(w1_ref.dtype)
    h = jnp.dot(x, w1_ref[...], preferred_element_type=jnp.float32)
    h = jnp.maximum(h + b1_ref[...], 0.0)          # bias + ReLU in f32 (VPU)
    # dropout: identity in eval mode
    y = jnp.dot(h.astype(w2_ref.dtype), w2_ref[...],
                preferred_element_type=jnp.float32)
    o_ref[...] = (y + b2_ref[...]).astype(o_ref.dtype)


def prepare_params(w1, b1, w2, b2, compute_dtype=jnp.bfloat16):
    """One-time (model-load) parameter preparation.

    Casts the weight matrices to the MXU compute dtype and reshapes the biases
    to (1, F) f32 rows.  Call this once and reuse the result across inference
    calls so no pad/cast work happens per call.
    """
    return dict(
        w1=jnp.asarray(w1, compute_dtype),
        b1=jnp.asarray(b1, jnp.float32).reshape(1, -1),
        w2=jnp.asarray(w2, compute_dtype),
        b2=jnp.asarray(b2, jnp.float32).reshape(1, -1),
    )


def infer_nn_forward(x, params, *, bm=None):
    """Fused ReLU(x@W1+b1)@W2+b2 forward (eval mode).

    x      : (B, in_features) float32
    params : dict from prepare_params() (weights already in compute dtype)
    bm     : optional rows-per-grid-step override.
    """
    w1, b1, w2, b2 = params["w1"], params["b1"], params["w2"], params["b2"]
    B, in_f = x.shape
    hid_f = w1.shape[1]
    out_f = w2.shape[1]
    assert w1.shape[0] == in_f and w2.shape[0] == hid_f

    if B < _PALLAS_MIN_ROWS:
        # Tiny batch: XLA fuses this into one or two ops; the pallas_call
        # dispatch would dominate the ~0 FLOPs of real work.
        h = jnp.maximum(
            jnp.dot(x.astype(w1.dtype), w1,
                    preferred_element_type=jnp.float32) + b1, 0.0)
        y = jnp.dot(h.astype(w2.dtype), w2,
                    preferred_element_type=jnp.float32) + b2
        return y.astype(x.dtype)

    # Batch tile: single step for modest B, >=2 parallel steps (one per v7x
    # TensorCore) once B is large, capped at _BM_CAP rows per step.
    if bm is None:
        n_steps = pl.cdiv(B, _BM_CAP)
        if n_steps < 2 and B > _SPLIT_ROWS:
            n_steps = 2
        bm = _round_up(pl.cdiv(B, n_steps), _ROW_MULT)
    else:
        bm = _round_up(bm, _ROW_MULT)
    if bm >= B:
        bm = B  # one block covering the whole batch (full-dim block is legal)
    grid = (pl.cdiv(B, bm),)

    cost = pl.CostEstimate(
        flops=2 * B * (in_f * hid_f + hid_f * out_f),
        transcendentals=0,
        bytes_accessed=(x.size * x.dtype.itemsize
                        + w1.size * w1.dtype.itemsize
                        + w2.size * w2.dtype.itemsize
                        + (b1.size + b2.size) * 4
                        + B * out_f * x.dtype.itemsize))

    return pl.pallas_call(
        _mlp_kernel,
        out_shape=jax.ShapeDtypeStruct((B, out_f), x.dtype),
        grid=grid,
        in_specs=[
            pl.BlockSpec((bm, in_f), lambda i: (i, 0)),       # x tile (ragged tail OK)
            pl.BlockSpec((in_f, hid_f), lambda i: (0, 0)),    # W1 (grid-invariant)
            pl.BlockSpec((1, hid_f), lambda i: (0, 0)),       # b1
            pl.BlockSpec((hid_f, out_f), lambda i: (0, 0)),   # W2 (grid-invariant)
            pl.BlockSpec((1, out_f), lambda i: (0, 0)),       # b2
        ],
        out_specs=pl.BlockSpec((bm, out_f), lambda i: (i, 0)),
        compiler_params=pltpu.CompilerParams(
            dimension_semantics=("parallel",),
        ),
        cost_estimate=cost,
    )(x, w1, b1, w2, b2)


def _reference(x, w1, b1, w2, b2):
    h = jnp.maximum(x @ w1 + b1, 0.0)
    return h @ w2 + b2


if __name__ == "__main__":
    # Small shapes implied by the forward: ConfigAe gives in/hid/out features.
    IN_FEATURES = 32    # conf.in_features
    HID_FEATURES = 64   # conf.hid_features
    OUT_FEATURES = 32   # conf.out_features

    key = jax.random.PRNGKey(0)
    kx, k1, k2, k3, k4 = jax.random.split(key, 5)

    # Deterministic synthetic parameters (stand-in for torch.load checkpoint).
    w1 = jax.random.normal(k1, (IN_FEATURES, HID_FEATURES), dtype=jnp.float32) * 0.1
    b1 = jax.random.normal(k2, (HID_FEATURES,), dtype=jnp.float32) * 0.01
    w2 = jax.random.normal(k3, (HID_FEATURES, OUT_FEATURES), dtype=jnp.float32) * 0.1
    b2 = jax.random.normal(k4, (OUT_FEATURES,), dtype=jnp.float32) * 0.01

    # Weight prep happens once (model-load time), not per call.
    params_f32 = prepare_params(w1, b1, w2, b2, compute_dtype=jnp.float32)
    params_bf16 = prepare_params(w1, b1, w2, b2, compute_dtype=jnp.bfloat16)

    # --- f32 Pallas path, single grid step (exact vs reference) ---
    B = 128
    x = jax.random.normal(kx, (B, IN_FEATURES), dtype=jnp.float32)
    y = jax.block_until_ready(infer_nn_forward(x, params_f32))
    y_ref = _reference(x, w1, b1, w2, b2)
    assert y.shape == (B, OUT_FEATURES)
    assert jnp.allclose(y, y_ref, atol=1e-4, rtol=1e-4), "f32 mismatch vs reference"

    # --- bf16 MXU path, ragged batch + multi-step grid (bm=32 -> 3 steps) ---
    B2 = 90
    x2 = jax.random.normal(jax.random.PRNGKey(1), (B2, IN_FEATURES), dtype=jnp.float32)
    y2 = jax.block_until_ready(infer_nn_forward(x2, params_bf16, bm=32))
    y2_ref = _reference(x2, w1, b1, w2, b2)
    assert y2.shape == (B2, OUT_FEATURES)
    assert jnp.allclose(y2, y2_ref, atol=5e-2, rtol=5e-2), "bf16 mismatch vs reference"

    # --- tiny batch: fused jnp fallback (dispatch-overhead path) ---
    B3 = 8
    x3 = jax.random.normal(jax.random.PRNGKey(2), (B3, IN_FEATURES), dtype=jnp.float32)
    y3 = jax.block_until_ready(infer_nn_forward(x3, params_bf16))
    y3_ref = _reference(x3, w1, b1, w2, b2)
    assert y3.shape == (B3, OUT_FEATURES)
    assert jnp.allclose(y3, y3_ref, atol=5e-2, rtol=5e-2), "tiny-batch mismatch"

    print("KERNEL_OK")
</pallas_src>

<mosaic_0001>
module attributes {stable_mosaic.version = 11 : i64} {
  func.func @_mlp_kernel(%arg0: i32, %arg1: memref<128x32xf32, #tpu.memory_space<vmem>>, %arg2: memref<32x64xf32, #tpu.memory_space<vmem>>, %arg3: memref<1x64xf32, #tpu.memory_space<vmem>>, %arg4: memref<64x32xf32, #tpu.memory_space<vmem>>, %arg5: memref<1x32xf32, #tpu.memory_space<vmem>>, %arg6: memref<128x32xf32, #tpu.memory_space<vmem>>) attributes {dimension_semantics = [#tpu.dimension_semantics<parallel>], iteration_bounds = array<i64: 1>, scalar_prefetch = 0 : i64, scratch_operands = 0 : i64, tpu.core_type = #tpu.core_type<tc>, window_params = [{transform_indices = @transform_0, window_bounds = array<i64: 128, 32>}, {pipeline_mode = #tpu.pipeline_mode<synchronous>, transform_indices = @transform_1, window_bounds = array<i64: 32, 64>}, {pipeline_mode = #tpu.pipeline_mode<synchronous>, transform_indices = @transform_2, window_bounds = array<i64: 1, 64>}, {pipeline_mode = #tpu.pipeline_mode<synchronous>, transform_indices = @transform_3, window_bounds = array<i64: 64, 32>}, {pipeline_mode = #tpu.pipeline_mode<synchronous>, transform_indices = @transform_4, window_bounds = array<i64: 1, 32>}, {transform_indices = @transform_5, window_bounds = array<i64: 128, 32>}]} {
    %c0 = arith.constant 0 : index
    %c0_0 = arith.constant 0 : index
    %0 = vector.load %arg1[%c0, %c0_0] : memref<128x32xf32, #tpu.memory_space<vmem>>, vector<128x32xf32>
    %c0_1 = arith.constant 0 : index
    %c0_2 = arith.constant 0 : index
    %1 = vector.load %arg2[%c0_1, %c0_2] : memref<32x64xf32, #tpu.memory_space<vmem>>, vector<32x64xf32>
    %cst = arith.constant dense<0.000000e+00> : vector<128x64xf32>
    %2 = tpu.matmul %0, %1, %cst {dimension_numbers = #tpu.dot_dimension_numbers<[1], [0], [0], [1], [0, 0, 1, 1], [], []>} : vector<128x32xf32>, vector<32x64xf32>, vector<128x64xf32> -> vector<128x64xf32>
    %c0_3 = arith.constant 0 : index
    %c0_4 = arith.constant 0 : index
    %3 = vector.load %arg3[%c0_3, %c0_4] : memref<1x64xf32, #tpu.memory_space<vmem>>, vector<1x64xf32>
    %4 = vector.broadcast %3 : vector<1x64xf32> to vector<128x64xf32>
    %5 = arith.addf %2, %4 : vector<128x64xf32>
    %cst_5 = arith.constant 0.000000e+00 : f32
    %6 = vector.broadcast %cst_5 : f32 to vector<128x64xf32>
    %7 = arith.maximumf %5, %6 : vector<128x64xf32>
    %c0_6 = arith.constant 0 : index
    %c0_7 = arith.constant 0 : index
    %8 = vector.load %arg4[%c0_6, %c0_7] : memref<64x32xf32, #tpu.memory_space<vmem>>, vector<64x32xf32>
    %cst_8 = arith.constant dense<0.000000e+00> : vector<128x32xf32>
    %9 = tpu.matmul %7, %8, %cst_8 {dimension_numbers = #tpu.dot_dimension_numbers<[1], [0], [0], [1], [0, 0, 1, 1], [], []>} : vector<128x64xf32>, vector<64x32xf32>, vector<128x32xf32> -> vector<128x32xf32>
    %c0_9 = arith.constant 0 : index
    %c0_10 = arith.constant 0 : index
    %10 = vector.load %arg5[%c0_9, %c0_10] : memref<1x32xf32, #tpu.memory_space<vmem>>, vector<1x32xf32>
    %11 = vector.broadcast %10 : vector<1x32xf32> to vector<128x32xf32>
    %12 = arith.addf %9, %11 : vector<128x32xf32>
    %c0_11 = arith.constant 0 : index
    %c0_12 = arith.constant 0 : index
    %13 = vector.load %arg6[%c0_11, %c0_12] : memref<128x32xf32, #tpu.memory_space<vmem>>, vector<128x32xf32>
    tpu.vector_store %arg6[%c0_11, %c0_12], %12 {strides = array<i32>} : memref<128x32xf32, #tpu.memory_space<vmem>>, vector<128x32xf32>,
    return
  }
  func.func @transform_0(%arg0: i32) -> (i32, i32) {
    %c0_i32 = arith.constant 0 : i32
    %c0_i32_0 = arith.constant 0 : i32
    return %arg0, %c0_i32 : i32, i32
  }
  func.func @transform_1(%arg0: i32) -> (i32, i32) {
    %c0_i32 = arith.constant 0 : i32
    %c0_i32_0 = arith.constant 0 : i32
    %c0_i32_1 = arith.constant 0 : i32
    return %c0_i32, %c0_i32_0 : i32, i32
  }
  func.func @transform_2(%arg0: i32) -> (i32, i32) {
    %c0_i32 = arith.constant 0 : i32
    %c0_i32_0 = arith.constant 0 : i32
    %c0_i32_1 = arith.constant 0 : i32
    return %c0_i32, %c0_i32_0 : i32, i32
  }
  func.func @transform_3(%arg0: i32) -> (i32, i32) {
    %c0_i32 = arith.constant 0 : i32
    %c0_i32_0 = arith.constant 0 : i32
    %c0_i32_1 = arith.constant 0 : i32
    return %c0_i32, %c0_i32_0 : i32, i32
  }
  func.func @transform_4(%arg0: i32) -> (i32, i32) {
    %c0_i32 = arith.constant 0 : i32
    %c0_i32_0 = arith.constant 0 : i32
    %c0_i32_1 = arith.constant 0 : i32
    return %c0_i32, %c0_i32_0 : i32, i32
  }
  func.func @transform_5(%arg0: i32) -> (i32, i32) {
    %c0_i32 = arith.constant 0 : i32
    %c0_i32_0 = arith.constant 0 : i32
    return %arg0, %c0_i32 : i32, i32
  }
}

</mosaic_0001>

<llo_original>
// kernel: tpu_custom_call.1
$region0: #{tpu_custom_call.1}
  #allocation0 [shape = 'u32[]', space=smem, size = 0x4, offset = 0x4, fixed_abs, tag = 'smem constant byte address 0x4 - core index']
  #allocation1 [shape = 'u32[144,128]{1,0:T(1,128)}', space=vmem, size = 0x12000, scoped, tag = 'internal scratch']
  %s0 = inlined_call_operand.vmem [shape: f32[128,32], index: 0, kind: input, shape index: {}]
  %s1 = inlined_call_operand.vmem [shape: f32[32,64], index: 1, kind: input, shape index: {}]
  %s2 = inlined_call_operand.vmem [shape: f32[1,64], index: 2, kind: input, shape index: {}]
  %s3 = inlined_call_operand.vmem [shape: f32[64,32], index: 3, kind: input, shape index: {}]
  %s4 = inlined_call_operand.vmem [shape: f32[1,32], index: 4, kind: input, shape index: {}]
  %s5 = inlined_call_operand.vmem [shape: f32[128,32], index: 5, kind: output, shape index: {}]
  %s6 = sld [smem:[#allocation0]]
  $region30: #{tpu_custom_call.1} parent=0
    _
  %s8 = ssub.s32 1, %s6
  %s9 = scalar_select 0, %s8, %s6
  // Predicated region
  $region2: #{tpu_custom_call.1} parent=0 // pred_check
    _
  $region3: #{tpu_custom_call.1} parent=0 // pred_check_branch
    %11 = sbr.rel (0) target = $region5
  $region4: #{tpu_custom_call.1} parent=0 // pred_region
    _
  $region5: #{tpu_custom_call.1} parent=0 // pred_fallthru
    _
  // Predicated region
  $region6: #{tpu_custom_call.1} parent=0 // pred_check
    _
  $region7: #{tpu_custom_call.1} parent=0 // pred_check_branch
    %13 = sbr.rel (0) target = $region9
  $region8: #{tpu_custom_call.1} parent=0 // pred_region
    _
  $region9: #{tpu_custom_call.1} parent=0 // pred_fallthru
    _
  // Predicated region
  $region10: #{tpu_custom_call.1} parent=0 // pred_check
    _
  $region11: #{tpu_custom_call.1} parent=0 // pred_check_branch
    %15 = sbr.rel (0) target = $region13
  $region12: #{tpu_custom_call.1} parent=0 // pred_region
    _
  $region13: #{tpu_custom_call.1} parent=0 // pred_fallthru
    _
  // Predicated region
  $region14: #{tpu_custom_call.1} parent=0 // pred_check
    _
  $region15: #{tpu_custom_call.1} parent=0 // pred_check_branch
    %17 = sbr.rel (0) target = $region17
  $region16: #{tpu_custom_call.1} parent=0 // pred_region
    _
  $region17: #{tpu_custom_call.1} parent=0 // pred_fallthru
    _
  // Predicated region
  $region18: #{tpu_custom_call.1} parent=0 // pred_check
    _
  $region19: #{tpu_custom_call.1} parent=0 // pred_check_branch
    %19 = sbr.rel (0) target = $region21
  $region20: #{tpu_custom_call.1} parent=0 // pred_region
    _
  $region21: #{tpu_custom_call.1} parent=0 // pred_fallthru
    _
  %v20 = vld [vmem:[%s0] sm:$0xff]
  %v21 = vld [vmem:[%s0 + $0x8] sm:$0xff]
  %v22 = vld [vmem:[%s0 + $0x10] sm:$0xff]
  %v23 = vld [vmem:[%s0 + $0x18] sm:$0xff]
  %v24 = vld [vmem:[%s0 + $0x20] sm:$0xff]
  %v25 = vld [vmem:[%s0 + $0x28] sm:$0xff]
  %v26 = vld [vmem:[%s0 + $0x30] sm:$0xff]
  %v27 = vld [vmem:[%s0 + $0x38] sm:$0xff]
  %v28 = vld [vmem:[%s0 + $0x40] sm:$0xff]
  %v29 = vld [vmem:[%s0 + $0x48] sm:$0xff]
  %v30 = vld [vmem:[%s0 + $0x50] sm:$0xff]
  %v31 = vld [vmem:[%s0 + $0x58] sm:$0xff]
  %v32 = vld [vmem:[%s0 + $0x60] sm:$0xff]
  %v33 = vld [vmem:[%s0 + $0x68] sm:$0xff]
  %v34 = vld [vmem:[%s0 + $0x70] sm:$0xff]
  %v35 = vld [vmem:[%s0 + $0x78] sm:$0xff]
  %v36 = vld [vmem:[%s1] sm:$0xff]
  %v37 = vld [vmem:[%s1 + $0x8] sm:$0xff]
  %v38 = vld [vmem:[%s1 + $0x10] sm:$0xff]
  %v39 = vld [vmem:[%s1 + $0x18] sm:$0xff]
  %v40 = vld [vmem:[%s2] sm:$0x1]
  %v42 = vlaneseq
  %v43 = vshrl.u32 %v42, 7
  %v44 = vsub.s32 0, %v43
  %v45 = vrot.slane %v40, %v44
  %vm47 = vcmask 261120
  %v49 = vsel %vm47, %v20, 0
  %v52 = vsel %vm47, %v21, 0
  %v55 = vsel %vm47, %v22, 0
  %v58 = vsel %vm47, %v23, 0
  %v61 = vsel %vm47, %v24, 0
  %v64 = vsel %vm47, %v25, 0
  %v67 = vsel %vm47, %v26, 0
  %v70 = vsel %vm47, %v27, 0
  %v73 = vsel %vm47, %v28, 0
  %v76 = vsel %vm47, %v29, 0
  %v79 = vsel %vm47, %v30, 0
  %v82 = vsel %vm47, %v31, 0
  %v85 = vsel %vm47, %v32, 0
  %v88 = vsel %vm47, %v33, 0
  %v91 = vsel %vm47, %v34, 0
  %v94 = vsel %vm47, %v35, 0
  %96 = vmatprep.subr.mxu0 0.0
  %97 = vmatpush1.msra.mxu0 %v36
  %98 = vmatprep.subr.mxu0 0.0
  %99 = vmatpush1.msra.mxu0 %v37
  %100 = vmatprep.subr.mxu0 0.0
  %101 = vmatpush1.msra.mxu0 %v38
  %102 = vmatprep.subr.mxu0 0.0
  %103 = vmatpush1.msra.mxu0 %v39
  %104 = vmatprep.subr.mxu0 0.0
  %105 = vmatpush1.msra.mxu0 0.0
  %106 = vmatprep.subr.mxu0 0.0
  %107 = vmatpush1.msra.mxu0 0.0
  %108 = vmatprep.subr.mxu0 0.0
  %109 = vmatpush1.msra.mxu0 0.0
  %110 = vmatprep.subr.mxu0 0.0
  %111 = vmatpush1.msra.mxu0 0.0
  %112 = vmatprep.subr.mxu0 0.0
  %113 = vmatpush1.msra.mxu0 0.0
  %114 = vmatprep.subr.mxu0 0.0
  %115 = vmatpush1.msra.mxu0 0.0
  %116 = vmatprep.subr.mxu0 0.0
  %117 = vmatpush1.msra.mxu0 0.0
  %118 = vmatprep.subr.mxu0 0.0
  %119 = vmatpush1.msra.mxu0 0.0
  %120 = vmatprep.subr.mxu0 0.0
  %121 = vmatpush1.msra.mxu0 0.0
  %122 = vmatprep.subr.mxu0 0.0
  %123 = vmatpush1.msra.mxu0 0.0
  %124 = vmatprep.subr.mxu0 0.0
  %125 = vmatpush1.msra.mxu0 0.0
  %126 = vmatprep.subr.mxu0 0.0
  %127 = vmatpush1.msra.mxu0 0.0
  %128 = vmatprep.subr.mxu0 0.0
  %129 = vmatpush1.msra.mxu0 0.0
  %130 = vmatprep.subr.mxu0 0.0
  %131 = vmatpush1.msra.mxu0 0.0
  %132 = vmatprep.subr.mxu0 0.0
  %133 = vmatpush1.msra.mxu0 0.0
  %134 = vmatprep.subr.mxu0 0.0
  %135 = vmatpush1.msra.mxu0 0.0
  %136 = vmatprep.subr.mxu0 0.0
  %137 = vmatpush1.msra.mxu0 0.0
  %138 = vmatprep.subr.mxu0 0.0
  %139 = vmatpush1.msra.mxu0 0.0
  %140 = vmatprep.subr.mxu0 0.0
  %141 = vmatpush1.msra.mxu0 0.0
  %142 = vmatprep.subr.mxu0 0.0
  %143 = vmatpush1.msra.mxu0 0.0
  %144 = vmatprep.subr.mxu0 0.0
  %145 = vmatpush1.msra.mxu0 0.0
  %146 = vmatprep.subr.mxu0 0.0
  %147 = vmatpush1.msra.mxu0 0.0
  %148 = vmatprep.subr.mxu0 0.0
  %149 = vmatpush1.msra.mxu0 0.0
  %150 = vmatprep.subr.mxu0 0.0
  %151 = vmatpush1.msra.mxu0 0.0
  %152 = vmatprep.subr.mxu0 0.0
  %153 = vmatpush1.msra.mxu0 0.0
  %154 = vmatprep.subr.mxu0 0.0
  %155 = vmatpush1.msra.mxu0 0.0
  %156 = vmatprep.subr.mxu0 0.0
  %157 = vmatpush1.msra.mxu0 0.0
  %158 = vmatprep.subr.mxu0 0.0
  %159 = vmatpush1.msra.mxu0 0.0
  %160 = vmatprep.mubr.f32.mxu0 0.0
  %161 = vmatmul.mubr.f32.gmra.mrb[0].mxu0 %v49
  %v162 = vpop.f32.mrb[0].mxu0
  %v163 = vadd.f32 %v45, %v162
  %v164 = vpop.f32.mrb[0].mxu0
  %165 = vmatprep.mubr.f32.mxu0 0.0
  %166 = vmatmul.mubr.f32.gmra.mrb[0].mxu0 %v52
  %v167 = vpop.f32.mrb[0].mxu0
  %v168 = vadd.f32 %v45, %v167
  %v169 = vpop.f32.mrb[0].mxu0
  %170 = vmatprep.mubr.f32.mxu0 0.0
  %171 = vmatmul.mubr.f32.gmra.mrb[0].mxu0 %v55
  %v172 = vpop.f32.mrb[0].mxu0
  %v173 = vadd.f32 %v45, %v172
  %v174 = vpop.f32.mrb[0].mxu0
  %175 = vmatprep.mubr.f32.mxu0 0.0
  %176 = vmatmul.mubr.f32.gmra.mrb[0].mxu0 %v58
  %v177 = vpop.f32.mrb[0].mxu0
  %v178 = vadd.f32 %v45, %v177
  %v179 = vpop.f32.mrb[0].mxu0
  %180 = vmatprep.mubr.f32.mxu0 0.0
  %181 = vmatmul.mubr.f32.gmra.mrb[0].mxu0 %v61
  %v182 = vpop.f32.mrb[0].mxu0
  %v183 = vadd.f32 %v45, %v182
  %v184 = vpop.f32.mrb[0].mxu0
  %185 = vmatprep.mubr.f32.mxu0 0.0
  %186 = vmatmul.mubr.f32.gmra.mrb[0].mxu0 %v64
  %v187 = vpop.f32.mrb[0].mxu0
  %v188 = vadd.f32 %v45, %v187
  %v189 = vpop.f32.mrb[0].mxu0
  %190 = vmatprep.mubr.f32.mxu0 0.0
  %191 = vmatmul.mubr.f32.gmra.mrb[0].mxu0 %v67
  %v192 = vpop.f32.mrb[0].mxu0
  %v193 = vadd.f32 %v45, %v192
  %v194 = vpop.f32.mrb[0].mxu0
  %195 = vmatprep.mubr.f32.mxu0 0.0
  %196 = vmatmul.mubr.f32.gmra.mrb[0].mxu0 %v70
  %v197 = vpop.f32.mrb[0].mxu0
  %v198 = vadd.f32 %v45, %v197
  %v199 = vpop.f32.mrb[0].mxu0
  %200 = vmatprep.mubr.f32.mxu0 0.0
  %201 = vmatmul.mubr.f32.gmra.mrb[0].mxu0 %v73
  %v202 = vpop.f32.mrb[0].mxu0
  %v203 = vadd.f32 %v45, %v202
  %v204 = vpop.f32.mrb[0].mxu0
  %205 = vmatprep.mubr.f32.mxu0 0.0
  %206 = vmatmul.mubr.f32.gmra.mrb[0].mxu0 %v76
  %v207 = vpop.f32.mrb[0].mxu0
  %v208 = vadd.f32 %v45, %v207
  %v209 = vpop.f32.mrb[0].mxu0
  %210 = vmatprep.mubr.f32.mxu0 0.0
  %211 = vmatmul.mubr.f32.gmra.mrb[0].mxu0 %v79
  %v212 = vpop.f32.mrb[0].mxu0
  %v213 = vadd.f32 %v45, %v212
  %v214 = vpop.f32.mrb[0].mxu0
  %215 = vmatprep.mubr.f32.mxu0 0.0
  %216 = vmatmul.mubr.f32.gmra.mrb[0].mxu0 %v82
  %v217 = vpop.f32.mrb[0].mxu0
  %v218 = vadd.f32 %v45, %v217
  %v219 = vpop.f32.mrb[0].mxu0
  %220 = vmatprep.mubr.f32.mxu0 0.0
  %221 = vmatmul.mubr.f32.gmra.mrb[0].mxu0 %v85
  %v222 = vpop.f32.mrb[0].mxu0
  %v223 = vadd.f32 %v45, %v222
  %v224 = vpop.f32.mrb[0].mxu0
  %225 = vmatprep.mubr.f32.mxu0 0.0
  %226 = vmatmul.mubr.f32.gmra.mrb[0].mxu0 %v88
  %v227 = vpop.f32.mrb[0].mxu0
  %v228 = vadd.f32 %v45, %v227
  %v229 = vpop.f32.mrb[0].mxu0
  %230 = vmatprep.mubr.f32.mxu0 0.0
  %231 = vmatmul.mubr.f32.gmra.mrb[0].mxu0 %v91
  %v232 = vpop.f32.mrb[0].mxu0
  %v233 = vadd.f32 %v45, %v232
  %v234 = vpop.f32.mrb[0].mxu0
  %235 = vmatprep.mubr.f32.mxu0 0.0
  %236 = vmatmul.mubr.f32.gmra.mrb[0].mxu0 %v94
  %v237 = vpop.f32.mrb[0].mxu0
  %v238 = vadd.f32 %v45, %v237
  %v239 = vpop.f32.mrb[0].mxu0
  %240 = vdwg.mxu0
  %v241 = vmax.f32 %v163, 0.0
  %v242 = vmax.f32 %v168, 0.0
  %v243 = vmax.f32 %v173, 0.0
  %v244 = vmax.f32 %v178, 0.0
  %v245 = vmax.f32 %v183, 0.0
  %v246 = vmax.f32 %v188, 0.0
  %v247 = vmax.f32 %v193, 0.0
  %v248 = vmax.f32 %v198, 0.0
  %v249 = vmax.f32 %v203, 0.0
  %v250 = vmax.f32 %v208, 0.0
  %v251 = vmax.f32 %v213, 0.0
  %v252 = vmax.f32 %v218, 0.0
  %v253 = vmax.f32 %v223, 0.0
  %v254 = vmax.f32 %v228, 0.0
  %v255 = vmax.f32 %v233, 0.0
  %v256 = vmax.f32 %v238, 0.0
  %v257 = vld [vmem:[%s3] sm:$0xff]
  %v258 = vld [vmem:[%s3 + $0x8] sm:$0xff]
  %v259 = vld [vmem:[%s3 + $0x10] sm:$0xff]
  %v260 = vld [vmem:[%s3 + $0x18] sm:$0xff]
  %v261 = vld [vmem:[%s3 + $0x20] sm:$0xff]
  %v262 = vld [vmem:[%s3 + $0x28] sm:$0xff]
  %v263 = vld [vmem:[%s3 + $0x30] sm:$0xff]
  %v264 = vld [vmem:[%s3 + $0x38] sm:$0xff]
  %v265 = vld [vmem:[%s4] sm:$0x1]
  %v267 = vlaneseq
  %v268 = vshrl.u32 %v267, 7
  %v269 = vsub.s32 0, %v268
  %v270 = vrot.slane %v265, %v269
  %vm272 = vcmask 523264
  %v274 = vsel %vm272, %v241, 0
  %v277 = vsel %vm272, %v242, 0
  %v280 = vsel %vm272, %v243, 0
  %v283 = vsel %vm272, %v244, 0
  %v286 = vsel %vm272, %v245, 0
  %v289 = vsel %vm272, %v246, 0
  %v292 = vsel %vm272, %v247, 0
  %v295 = vsel %vm272, %v248, 0
  %v298 = vsel %vm272, %v249, 0
  %v301 = vsel %vm272, %v250, 0
  %v304 = vsel %vm272, %v251, 0
  %v307 = vsel %vm272, %v252, 0
  %v310 = vsel %vm272, %v253, 0
  %v313 = vsel %vm272, %v254, 0
  %v316 = vsel %vm272, %v255, 0
  %v319 = vsel %vm272, %v256, 0
  %321 = vmatprep.subr.mxu0 0.0
  %322 = vmatpush1.msra.mxu0 %v257
  %323 = vmatprep.subr.mxu0 0.0
  %324 = vmatpush1.msra.mxu0 %v258
  %325 = vmatprep.subr.mxu0 0.0
  %326 = vmatpush1.msra.mxu0 %v259
  %327 = vmatprep.subr.mxu0 0.0
  %328 = vmatpush1.msra.mxu0 %v260
  %329 = vmatprep.subr.mxu0 0.0
  %330 = vmatpush1.msra.mxu0 %v261
  %331 = vmatprep.subr.mxu0 0.0
  %332 = vmatpush1.msra.mxu0 %v262
  %333 = vmatprep.subr.mxu0 0.0
  %334 = vmatpush1.msra.mxu0 %v263
  %335 = vmatprep.subr.mxu0 0.0
  %336 = vmatpush1.msra.mxu0 %v264
  %337 = vmatprep.subr.mxu0 0.0
  %338 = vmatpush1.msra.mxu0 0.0
  %339 = vmatprep.subr.mxu0 0.0
  %340 = vmatpush1.msra.mxu0 0.0
  %341 = vmatprep.subr.mxu0 0.0
  %342 = vmatpush1.msra.mxu0 0.0
  %343 = vmatprep.subr.mxu0 0.0
  %344 = vmatpush1.msra.mxu0 0.0
  %345 = vmatprep.subr.mxu0 0.0
  %346 = vmatpush1.msra.mxu0 0.0
  %347 = vmatprep.subr.mxu0 0.0
  %348 = vmatpush1.msra.mxu0 0.0
  %349 = vmatprep.subr.mxu0 0.0
  %350 = vmatpush1.msra.mxu0 0.0
  %351 = vmatprep.subr.mxu0 0.0
  %352 = vmatpush1.msra.mxu0 0.0
  %353 = vmatprep.subr.mxu0 0.0
  %354 = vmatpush1.msra.mxu0 0.0
  %355 = vmatprep.subr.mxu0 0.0
  %356 = vmatpush1.msra.mxu0 0.0
  %357 = vmatprep.subr.mxu0 0.0
  %358 = vmatpush1.msra.mxu0 0.0
  %359 = vmatprep.subr.mxu0 0.0
  %360 = vmatpush1.msra.mxu0 0.0
  %361 = vmatprep.subr.mxu0 0.0
  %362 = vmatpush1.msra.mxu0 0.0
  %363 = vmatprep.subr.mxu0 0.0
  %364 = vmatpush1.msra.mxu0 0.0
  %365 = vmatprep.subr.mxu0 0.0
  %366 = vmatpush1.msra.mxu0 0.0
  %367 = vmatprep.subr.mxu0 0.0
  %368 = vmatpush1.msra.mxu0 0.0
  %369 = vmatprep.subr.mxu0 0.0
  %370 = vmatpush1.msra.mxu0 0.0
  %371 = vmatprep.subr.mxu0 0.0
  %372 = vmatpush1.msra.mxu0 0.0
  %373 = vmatprep.subr.mxu0 0.0
  %374 = vmatpush1.msra.mxu0 0.0
  %375 = vmatprep.subr.mxu0 0.0
  %376 = vmatpush1.msra.mxu0 0.0
  %377 = vmatprep.subr.mxu0 0.0
  %378 = vmatpush1.msra.mxu0 0.0
  %379 = vmatprep.subr.mxu0 0.0
  %380 = vmatpush1.msra.mxu0 0.0
  %381 = vmatprep.subr.mxu0 0.0
  %382 = vmatpush1.msra.mxu0 0.0
  %383 = vmatprep.subr.mxu0 0.0
  %384 = vmatpush1.msra.mxu0 0.0
  %385 = vmatprep.mubr.f32.mxu0 0.0
  %386 = vmatmul.mubr.f32.gmra.mrb[0].mxu0 %v274
  %v387 = vpop.f32.mrb[0].mxu0
  %v388 = vadd.f32 %v270, %v387
  %v389 = vpop.f32.mrb[0].mxu0
  %390 = vmatprep.mubr.f32.mxu0 0.0
  %391 = vmatmul.mubr.f32.gmra.mrb[0].mxu0 %v277
  %v392 = vpop.f32.mrb[0].mxu0
  %v393 = vadd.f32 %v270, %v392
  %v394 = vpop.f32.mrb[0].mxu0
  %395 = vmatprep.mubr.f32.mxu0 0.0
  %396 = vmatmul.mubr.f32.gmra.mrb[0].mxu0 %v280
  %v397 = vpop.f32.mrb[0].mxu0
  %v398 = vadd.f32 %v270, %v397
  %v399 = vpop.f32.mrb[0].mxu0
  %400 = vmatprep.mubr.f32.mxu0 0.0
  %401 = vmatmul.mubr.f32.gmra.mrb[0].mxu0 %v283
  %v402 = vpop.f32.mrb[0].mxu0
  %v403 = vadd.f32 %v270, %v402
  %v404 = vpop.f32.mrb[0].mxu0
  %405 = vmatprep.mubr.f32.mxu0 0.0
  %406 = vmatmul.mubr.f32.gmra.mrb[0].mxu0 %v286
  %v407 = vpop.f32.mrb[0].mxu0
  %v408 = vadd.f32 %v270, %v407
  %v409 = vpop.f32.mrb[0].mxu0
  %410 = vmatprep.mubr.f32.mxu0 0.0
  %411 = vmatmul.mubr.f32.gmra.mrb[0].mxu0 %v289
  %v412 = vpop.f32.mrb[0].mxu0
  %v413 = vadd.f32 %v270, %v412
  %v414 = vpop.f32.mrb[0].mxu0
  %415 = vmatprep.mubr.f32.mxu0 0.0
  %416 = vmatmul.mubr.f32.gmra.mrb[0].mxu0 %v292
  %v417 = vpop.f32.mrb[0].mxu0
  %v418 = vadd.f32 %v270, %v417
  %v419 = vpop.f32.mrb[0].mxu0
  %420 = vmatprep.mubr.f32.mxu0 0.0
  %421 = vmatmul.mubr.f32.gmra.mrb[0].mxu0 %v295
  %v422 = vpop.f32.mrb[0].mxu0
  %v423 = vadd.f32 %v270, %v422
  %v424 = vpop.f32.mrb[0].mxu0
  %425 = vmatprep.mubr.f32.mxu0 0.0
  %426 = vmatmul.mubr.f32.gmra.mrb[0].mxu0 %v298
  %v427 = vpop.f32.mrb[0].mxu0
  %v428 = vadd.f32 %v270, %v427
  %v429 = vpop.f32.mrb[0].mxu0
  %430 = vmatprep.mubr.f32.mxu0 0.0
  %431 = vmatmul.mubr.f32.gmra.mrb[0].mxu0 %v301
  %v432 = vpop.f32.mrb[0].mxu0
  %v433 = vadd.f32 %v270, %v432
  %v434 = vpop.f32.mrb[0].mxu0
  %435 = vmatprep.mubr.f32.mxu0 0.0
  %436 = vmatmul.mubr.f32.gmra.mrb[0].mxu0 %v304
  %v437 = vpop.f32.mrb[0].mxu0
  %v438 = vadd.f32 %v270, %v437
  %v439 = vpop.f32.mrb[0].mxu0
  %440 = vmatprep.mubr.f32.mxu0 0.0
  %441 = vmatmul.mubr.f32.gmra.mrb[0].mxu0 %v307
  %v442 = vpop.f32.mrb[0].mxu0
  %v443 = vadd.f32 %v270, %v442
  %v444 = vpop.f32.mrb[0].mxu0
  %445 = vmatprep.mubr.f32.mxu0 0.0
  %446 = vmatmul.mubr.f32.gmra.mrb[0].mxu0 %v310
  %v447 = vpop.f32.mrb[0].mxu0
  %v448 = vadd.f32 %v270, %v447
  %v449 = vpop.f32.mrb[0].mxu0
  %450 = vmatprep.mubr.f32.mxu0 0.0
  %451 = vmatmul.mubr.f32.gmra.mrb[0].mxu0 %v313
  %v452 = vpop.f32.mrb[0].mxu0
  %v453 = vadd.f32 %v270, %v452
  %v454 = vpop.f32.mrb[0].mxu0
  %455 = vmatprep.mubr.f32.mxu0 0.0
  %456 = vmatmul.mubr.f32.gmra.mrb[0].mxu0 %v316
  %v457 = vpop.f32.mrb[0].mxu0
  %v458 = vadd.f32 %v270, %v457
  %v459 = vpop.f32.mrb[0].mxu0
  %460 = vmatprep.mubr.f32.mxu0 0.0
  %461 = vmatmul.mubr.f32.gmra.mrb[0].mxu0 %v319
  %v462 = vpop.f32.mrb[0].mxu0
  %v463 = vadd.f32 %v270, %v462
  %v464 = vpop.f32.mrb[0].mxu0
  %465 = vdwg.mxu0
  %466 = vst.msk [vmem:[%s5] sm:$0xff] %vm47, %v388
  %467 = vst.msk [vmem:[%s5 + $0x8] sm:$0xff] %vm47, %v393
  %468 = vst.msk [vmem:[%s5 + $0x10] sm:$0xff] %vm47, %v398
  %469 = vst.msk [vmem:[%s5 + $0x18] sm:$0xff] %vm47, %v403
  %470 = vst.msk [vmem:[%s5 + $0x20] sm:$0xff] %vm47, %v408
  %471 = vst.msk [vmem:[%s5 + $0x28] sm:$0xff] %vm47, %v413
  %472 = vst.msk [vmem:[%s5 + $0x30] sm:$0xff] %vm47, %v418
  %473 = vst.msk [vmem:[%s5 + $0x38] sm:$0xff] %vm47, %v423
  %474 = vst.msk [vmem:[%s5 + $0x40] sm:$0xff] %vm47, %v428
  %475 = vst.msk [vmem:[%s5 + $0x48] sm:$0xff] %vm47, %v433
  %476 = vst.msk [vmem:[%s5 + $0x50] sm:$0xff] %vm47, %v438
  %477 = vst.msk [vmem:[%s5 + $0x58] sm:$0xff] %vm47, %v443
  %478 = vst.msk [vmem:[%s5 + $0x60] sm:$0xff] %vm47, %v448
  %479 = vst.msk [vmem:[%s5 + $0x68] sm:$0xff] %vm47, %v453
  %480 = vst.msk [vmem:[%s5 + $0x70] sm:$0xff] %vm47, %v458
  %481 = vst.msk [vmem:[%s5 + $0x78] sm:$0xff] %vm47, %v463
  // Predicated region
  $region22: #{tpu_custom_call.1} parent=0 // pred_check
    _
  $region23: #{tpu_custom_call.1} parent=0 // pred_check_branch
    %483 = sbr.rel (0) target = $region25
  $region24: #{tpu_custom_call.1} parent=0 // pred_region
    _
  $region25: #{tpu_custom_call.1} parent=0 // pred_fallthru
    _
  // Predicated region
  $region26: #{tpu_custom_call.1} parent=0 // pred_check
    _
  $region27: #{tpu_custom_call.1} parent=0 // pred_check_branch
    %485 = sbr.rel (0) target = $region29
  $region28: #{tpu_custom_call.1} parent=0 // pred_region
    _
  $region29: #{tpu_custom_call.1} parent=0 // pred_fallthru
    _

</llo_original>
